<compile_context>
chip_gen: v6e
topology: v6e:2x2x1
jax: 0.10.0
libtpu: 0.0.40
codegen_flags: <defaults>
</compile_context>

<pallas_src>
import jax
import jax.numpy as jnp
from jax.experimental import pallas as pl
from jax.experimental.pallas import tpu as pltpu

_LANES = 128
_TARGET_BLOCK_BYTES = 4 << 20   # ~4 MiB / block -> 2 ops x 2 bufs x 4 MiB = 16 MiB VMEM
_VMEM_LIMIT_BYTES = 32 << 20    # 2x headroom over the pipeline footprint; raises v5e's
                                # 16 MiB scoped default, == the v6e/v7x scoped default.


def _identity_kernel(x_ref, o_ref):
    # Forward pass of Identity: o = x (straight VMEM tile copy).
    o_ref[...] = x_ref[...]


def _is_v7x() -> bool:
    try:
        return "v7" in jax.devices()[0].device_kind.lower()
    except Exception:
        return False


def _pick_block_rows(rows: int, row_bytes: int) -> int:
    """Rows per block: full-array, or a multiple-of-32 divisor of `rows` near budget."""
    # Whole array as one block when it fits the per-block budget: block_shape == full
    # array dims is exempt from the (8,128) divisibility rule -> one unmasked grid step.
    if rows * row_bytes <= _TARGET_BLOCK_BYTES:
        return rows
    budget_rows = max(32, _TARGET_BLOCK_BYTES // row_bytes)
    # Prefer the largest multiple-of-32 divisor of rows within budget: every block is
    # full (no ragged tail step, no masked partial stores) for any >=1-byte dtype's
    # sublane packing (f32:8, bf16:16, int8:32).
    d = (budget_rows // 32) * 32
    while d >= 32:
        if rows % d == 0:
            return d
        d -= 32
    # Next best: a multiple-of-8 divisor (still full blocks; 8 = f32 sublane tile).
    d = (budget_rows // 8) * 8
    while d >= 8:
        if rows % d == 0:
            return d
        d -= 8
    # Last resort: accept one short trailing block (correct, slightly slower last step).
    return max(32, (budget_rows // 32) * 32)


def _copy_2d(x2d: jax.Array) -> jax.Array:
    """Tiled HBM->HBM copy of a (rows, cols) array; cols is a multiple of 128."""
    rows, cols = x2d.shape
    itemsize = jnp.dtype(x2d.dtype).itemsize
    row_bytes = cols * itemsize
    block_rows = _pick_block_rows(rows, row_bytes)
    grid = (pl.cdiv(rows, block_rows),)

    def build(dim_sem):
        return pl.pallas_call(
            _identity_kernel,
            out_shape=jax.ShapeDtypeStruct((rows, cols), x2d.dtype),
            grid_spec=pltpu.PrefetchScalarGridSpec(
                num_scalar_prefetch=0,
                grid=grid,
                in_specs=[pl.BlockSpec((block_rows, cols), lambda i: (i, 0))],
                out_specs=pl.BlockSpec((block_rows, cols), lambda i: (i, 0)),
            ),
            compiler_params=pltpu.CompilerParams(
                dimension_semantics=dim_sem,
                vmem_limit_bytes=_VMEM_LIMIT_BYTES,
            ),
            cost_estimate=pl.CostEstimate(
                flops=0,
                transcendentals=0,
                bytes_accessed=2 * rows * cols * itemsize,
            ),
        )

    if grid[0] > 1 and _is_v7x():
        # Shard grid steps (and their DMA issue) across both v7x TensorCores.
        try:
            return build((pltpu.CORE_PARALLEL,))(x2d)
        except Exception:
            pass  # conservative fallback if CORE_PARALLEL lowering is unavailable
    return build(("parallel",))(x2d)


def _copy_flat_aligned(flat: jax.Array) -> jax.Array:
    """Copy a flat array whose length is a multiple of 128 (fast, pad-free path)."""
    n = flat.shape[0]
    cols = _LANES
    for c in (8192, 4096, 2048, 1024, 512, 256):  # widest lane-dense factor of n
        if n % c == 0:
            cols = c
            break
    return _copy_2d(flat.reshape(n // cols, cols)).reshape(n)


def identity(x: jax.Array) -> jax.Array:
    """Identity forward pass (`y = x`) via a Pallas TPU copy kernel."""
    orig_shape = x.shape
    n = x.size
    if n == 0:
        return x
    flat = x.reshape(-1)
    n_bulk = (n // _LANES) * _LANES
    if n_bulk == n:
        # Fast path (all NCHW ResNet feature maps): no pad, no post-slice -> ~2N bytes.
        return _copy_flat_aligned(flat).reshape(orig_shape)
    if n_bulk == 0:
        # Fewer than 128 elements: Identity's forward is literally `return x`.
        return x
    # Ragged path: copy the 128-aligned bulk through the kernel; splice the <128-element
    # tail in the wrapper (trivial traffic) instead of pad+copy+slice over the whole array.
    bulk = _copy_flat_aligned(flat[:n_bulk])
    return jnp.concatenate([bulk, flat[n_bulk:]]).reshape(orig_shape)


if __name__ == "__main__":
    key = jax.random.PRNGKey(0)
    # Shapes consistent with a ResNet feature-map input: NCHW.
    x = jax.random.normal(key, (2, 4, 16, 16), dtype=jnp.float32)

    y = identity(x)
    jax.block_until_ready(y)

    assert y.shape == x.shape and y.dtype == x.dtype
    assert bool(jnp.all(y == x))
    print("KERNEL_OK")
</pallas_src>

<mosaic_0001>
module attributes {stable_mosaic.version = 11 : i64} {
  func.func @_identity_kernel(%arg0: i32, %arg1: memref<1x2048xf32, #tpu.memory_space<vmem>>, %arg2: memref<1x2048xf32, #tpu.memory_space<vmem>>) attributes {dimension_semantics = [#tpu.dimension_semantics<parallel>], iteration_bounds = array<i64: 1>, scalar_prefetch = 0 : i64, scratch_operands = 0 : i64, tpu.core_type = #tpu.core_type<tc>, window_params = [{transform_indices = @transform_0, window_bounds = array<i64: 1, 2048>}, {transform_indices = @transform_1, window_bounds = array<i64: 1, 2048>}]} {
    %c0 = arith.constant 0 : index
    %c0_0 = arith.constant 0 : index
    %0 = vector.load %arg1[%c0, %c0_0] : memref<1x2048xf32, #tpu.memory_space<vmem>>, vector<1x2048xf32>
    %c0_1 = arith.constant 0 : index
    %c0_2 = arith.constant 0 : index
    %1 = vector.load %arg2[%c0_1, %c0_2] : memref<1x2048xf32, #tpu.memory_space<vmem>>, vector<1x2048xf32>
    tpu.vector_store %arg2[%c0_1, %c0_2], %0 {strides = array<i32>} : memref<1x2048xf32, #tpu.memory_space<vmem>>, vector<1x2048xf32>,
    return
  }
  func.func @transform_0(%arg0: i32) -> (i32, i32) {
    %c0_i32 = arith.constant 0 : i32
    %c0_i32_0 = arith.constant 0 : i32
    return %arg0, %c0_i32 : i32, i32
  }
  func.func @transform_1(%arg0: i32) -> (i32, i32) {
    %c0_i32 = arith.constant 0 : i32
    %c0_i32_0 = arith.constant 0 : i32
    return %arg0, %c0_i32 : i32, i32
  }
}

</mosaic_0001>

<llo_original>
// kernel: tpu_custom_call.1
$region0: #{tpu_custom_call.1}
  #allocation0 [shape = 'u32[]', space=smem, size = 0x4, offset = 0x4, fixed_abs, tag = 'smem constant byte address 0x4 - core index']
  #allocation1 [shape = 'u32[144,128]{1,0:T(1,128)}', space=vmem, size = 0x12000, scoped, tag = 'internal scratch']
  %s0 = inlined_call_operand.hbm [shape: f32[1,2048], index: 0, kind: input, shape index: {}]
  %s1 = inlined_call_operand.hbm [shape: f32[1,2048], index: 1, kind: output, shape index: {}]
  %s2 = sld [smem:[#allocation0]]
  $region18: #{tpu_custom_call.1} parent=0
    _
  %s4 = ssub.s32 1, %s2
  %s5 = scalar_select 0, %s4, %s2
  $region1: #{tpu_custom_call.1} parent=0
    #allocation2 [shape = 'u8[8192]{0}', space=vmem, size = 0x2000, scoped, tag = 'input window, operand 0, single buffered']
    #allocation3 [shape = 's32[1]{0}', space=sflag, size = 0x4, scoped, tag = 'scoped memory for tpu_custom_call.1']
    #allocation4 [shape = 's32[1]{0}', space=sflag, size = 0x4, scoped, tag = 'scoped memory for tpu_custom_call.1']
    #allocation5 [shape = 'u8[8192]{0}', space=vmem, size = 0x2000, scoped, tag = 'output window, operand 0, single buffered']
    %6 = vsyncpa [#allocation3], 0
    %7 = vsyncpa [#allocation4], 0
    // Predicated region
    $region2: #{tpu_custom_call.1} parent=1 // pred_check
      _
    $region3: #{tpu_custom_call.1} parent=1 // pred_check_branch
      %9 = sbr.rel (0) target = $region5
    $region4: #{tpu_custom_call.1} parent=1 // pred_region
      %s11 = ssub.s32 256, 256
      %12 = vsyncadd [#allocation3], %s11
      %s14 = sshll.u32 [#allocation2], 4
      %s15 = int_to_ptr.vmem [resolvable:$true] %s14
      %17 = dma.hbm_to_vmem [thread:$0]  %s0, 256, %s15, [#allocation3]
    $region5: #{tpu_custom_call.1} parent=1 // pred_fallthru
      _
    // Predicated region
    $region6: #{tpu_custom_call.1} parent=1 // pred_check
      _
    $region7: #{tpu_custom_call.1} parent=1 // pred_check_branch
      %19 = sbr.rel (0) target = $region9
    $region8: #{tpu_custom_call.1} parent=1 // pred_region
      %20 = dma.done [#allocation3], 256
    $region9: #{tpu_custom_call.1} parent=1 // pred_fallthru
      _
    %v21 = vld [vmem:[#allocation2] sm:$0xff]
    %v22 = vld [vmem:[#allocation2 + $0x8] sm:$0xff]
    %23 = vst [vmem:[#allocation5] sm:$0xff] %v21
    %24 = vst [vmem:[#allocation5 + $0x8] sm:$0xff] %v22
    // Predicated region
    $region10: #{tpu_custom_call.1} parent=1 // pred_check
      _
    $region11: #{tpu_custom_call.1} parent=1 // pred_check_branch
      %26 = sbr.rel (0) target = $region13
    $region12: #{tpu_custom_call.1} parent=1 // pred_region
      %s28 = ssub.s32 256, 256
      %29 = vsyncadd [#allocation4], %s28
      %s31 = sshll.u32 [#allocation5], 4
      %s32 = int_to_ptr.vmem [resolvable:$true] %s31
      %34 = dma.vmem_to_hbm [thread:$0]  %s32, 256, %s1, [#allocation4]
    $region13: #{tpu_custom_call.1} parent=1 // pred_fallthru
      _
    // Predicated region
    $region14: #{tpu_custom_call.1} parent=1 // pred_check
      _
    $region15: #{tpu_custom_call.1} parent=1 // pred_check_branch
      %36 = sbr.rel (0) target = $region17
    $region16: #{tpu_custom_call.1} parent=1 // pred_region
      %37 = dma.done [#allocation4], 256
    $region17: #{tpu_custom_call.1} parent=1 // pred_fallthru
      _
    %38 = vsyncpa [#allocation3], 1
    %39 = vsyncpa [#allocation4], 1

</llo_original>
